<compile_context>
chip_gen: v7x
topology: tpu7x:2x2x1
jax: 0.10.0
libtpu: 0.0.40
codegen_flags: <defaults>
</compile_context>

<pallas_src>
import functools

import jax
import jax.numpy as jnp
from jax.experimental import pallas as pl
from jax.experimental.pallas import tpu as pltpu


def _round_up(x, m):
    return (x + m - 1) // m * m


def _actor_kernel(x_ref, w1_ref, w2_ref, w3_ref, b_ref, o_ref, *,
                  h1_dim, h2_dim, a_pad, max_action):
    x = x_ref[...]

    # Layer 1: ReLU(x @ W1 + b1)   -- MXU matmul, f32 accumulate
    h1 = jnp.dot(x, w1_ref[...], preferred_element_type=jnp.float32)
    h1 = jnp.maximum(h1 + b_ref[0:1, 0:h1_dim], 0.0)

    # Layer 2: ReLU(h1 @ W2 + b2)
    h2 = jnp.dot(h1, w2_ref[...], preferred_element_type=jnp.float32)
    h2 = jnp.maximum(h2 + b_ref[1:2, 0:h2_dim], 0.0)

    # Layer 3: max_action * tanh(h2 @ W3 + b3).  W3/b3 are zero-padded to
    # a_pad lanes, so the padded columns produce tanh(0)=0 and the store is
    # lane-dense (unmasked vst).  Wrapper slices off the padding.
    h3 = jnp.dot(h2, w3_ref[...], preferred_element_type=jnp.float32)
    h3 = h3 + b_ref[2:3, 0:a_pad]
    o_ref[...] = (max_action * jnp.tanh(h3)).astype(o_ref.dtype)


def actor_forward(state, params, max_action, *, tb=None):
    """state: (B, state_dim) f32. params: dict of w1,b1,w2,b2,w3,b3."""
    w1, b1 = params["w1"], params["b1"]
    w2, b2 = params["w2"], params["b2"]
    w3, b3 = params["w3"], params["b3"]
    B, S = state.shape
    H1 = w1.shape[1]
    H2 = w2.shape[1]
    A = w3.shape[1]

    # Lane-dense output: pad action dim to a multiple of 128 (zero columns).
    A_pad = _round_up(A, 128)
    w3_p = jnp.zeros((H2, A_pad), jnp.float32).at[:, :A].set(w3)

    # One consolidated bias buffer; each row starts at lane 0, zero-padded.
    WB = _round_up(max(H1, H2, A_pad), 128)
    b_all = jnp.zeros((3, WB), jnp.float32)
    b_all = b_all.at[0, :H1].set(b1.reshape(-1))
    b_all = b_all.at[1, :H2].set(b2.reshape(-1))
    b_all = b_all.at[2, :A].set(b3.reshape(-1))

    # Batch tile: multiple of 8 (f32 sublanes); target up to 512 rows/step.
    if tb is None:
        tb = min(512, _round_up(B, 8))
    tb = max(8, _round_up(tb, 8))
    B_pad = _round_up(B, tb)
    if B_pad != B:
        state = jnp.pad(state, ((0, B_pad - B), (0, 0)))
    grid = (B_pad // tb,)

    kernel = functools.partial(
        _actor_kernel, h1_dim=H1, h2_dim=H2, a_pad=A_pad,
        max_action=float(max_action))

    flops = 2 * B_pad * (S * H1 + H1 * H2 + H2 * A_pad)
    transcendentals = B_pad * A_pad
    bytes_accessed = 4 * (B_pad * S + S * H1 + H1 * H2 + H2 * A_pad
                          + 3 * WB + B_pad * A_pad)

    out_padded = pl.pallas_call(
        kernel,
        out_shape=jax.ShapeDtypeStruct((B_pad, A_pad), jnp.float32),
        grid=grid,
        in_specs=[
            pl.BlockSpec((tb, S), lambda i: (i, 0)),        # activation tile
            pl.BlockSpec((S, H1), lambda i: (0, 0)),        # weights stay
            pl.BlockSpec((H1, H2), lambda i: (0, 0)),       # VMEM-resident
            pl.BlockSpec((H2, A_pad), lambda i: (0, 0)),    # across the grid
            pl.BlockSpec((3, WB), lambda i: (0, 0)),        # stacked biases
        ],
        out_specs=pl.BlockSpec((tb, A_pad), lambda i: (i, 0)),
        compiler_params=pltpu.CompilerParams(
            dimension_semantics=("parallel",)),             # 2 TCs on v7x
        cost_estimate=pl.CostEstimate(
            flops=flops, transcendentals=transcendentals,
            bytes_accessed=bytes_accessed),
    )(state, w1, w2, w3_p, b_all)

    return out_padded[:B, :A]


def init_actor_params(key, state_dim, neurons, action_dim):
    """Deterministic init mimicking nn.Linear default U(-1/sqrt(fan_in), 1/sqrt(fan_in))."""
    dims = [state_dim, neurons[0], neurons[1], action_dim]
    params = {}
    keys = jax.random.split(key, 6)
    for i in range(3):
        fan_in, fan_out = dims[i], dims[i + 1]
        bound = 1.0 / jnp.sqrt(jnp.float32(fan_in))
        w = jax.random.uniform(keys[2 * i], (fan_in, fan_out),
                               minval=-bound, maxval=bound, dtype=jnp.float32)
        b = jax.random.uniform(keys[2 * i + 1], (1, fan_out),
                               minval=-bound, maxval=bound, dtype=jnp.float32)
        params[f"w{i + 1}"] = w
        params[f"b{i + 1}"] = b
    return params


def actor_reference(state, params, max_action):
    a = jnp.maximum(state @ params["w1"] + params["b1"], 0.0)
    a = jnp.maximum(a @ params["w2"] + params["b2"], 0.0)
    return max_action * jnp.tanh(a @ params["w3"] + params["b3"])


if __name__ == "__main__":
    # Small shapes consistent with the module's forward.
    batch, state_dim, action_dim = 2, 16, 4
    neurons = [32, 32]
    max_action = 2.0

    key = jax.random.PRNGKey(0)
    pkey, xkey = jax.random.split(key)
    params = init_actor_params(pkey, state_dim, neurons, action_dim)
    state = jax.random.normal(xkey, (batch, state_dim), dtype=jnp.float32)

    out = actor_forward(state, params, max_action)
    out = jax.block_until_ready(out)

    ref = actor_reference(state, params, max_action)
    assert out.shape == (batch, action_dim)
    assert jnp.allclose(out, ref, atol=1e-5, rtol=1e-5), "mismatch vs reference"

    # Also exercise the batched/gridded path (multiple grid steps).
    big_state = jax.random.normal(jax.random.PRNGKey(1), (1024 + 3, state_dim),
                                  dtype=jnp.float32)
    big_out = jax.block_until_ready(
        actor_forward(big_state, params, max_action, tb=512))
    big_ref = actor_reference(big_state, params, max_action)
    assert big_out.shape == big_ref.shape
    assert jnp.allclose(big_out, big_ref, atol=1e-5, rtol=1e-5), "batched mismatch"

    # TODO(synk): for scaled-up hidden widths (e.g. 400/300 -> 1024+) on v6e/v7x,
    # cast x/W to bf16 for the dots (keep f32 accumulate) and re-derive VMEM budget.
    print("KERNEL_OK")
</pallas_src>

<mosaic_0001>
module attributes {stable_mosaic.version = 11 : i64} {
  func.func @_actor_kernel(%arg0: i32, %arg1: memref<8x16xf32, #tpu.memory_space<vmem>>, %arg2: memref<16x32xf32, #tpu.memory_space<vmem>>, %arg3: memref<32x32xf32, #tpu.memory_space<vmem>>, %arg4: memref<32x128xf32, #tpu.memory_space<vmem>>, %arg5: memref<3x128xf32, #tpu.memory_space<vmem>>, %arg6: memref<8x128xf32, #tpu.memory_space<vmem>>) attributes {dimension_semantics = [#tpu.dimension_semantics<parallel>], iteration_bounds = array<i64: 1>, scalar_prefetch = 0 : i64, scratch_operands = 0 : i64, tpu.core_type = #tpu.core_type<tc>, window_params = [{transform_indices = @transform_0, window_bounds = array<i64: 8, 16>}, {pipeline_mode = #tpu.pipeline_mode<synchronous>, transform_indices = @transform_1, window_bounds = array<i64: 16, 32>}, {pipeline_mode = #tpu.pipeline_mode<synchronous>, transform_indices = @transform_2, window_bounds = array<i64: 32, 32>}, {pipeline_mode = #tpu.pipeline_mode<synchronous>, transform_indices = @transform_3, window_bounds = array<i64: 32, 128>}, {pipeline_mode = #tpu.pipeline_mode<synchronous>, transform_indices = @transform_4, window_bounds = array<i64: 3, 128>}, {transform_indices = @transform_5, window_bounds = array<i64: 8, 128>}]} {
    %c0 = arith.constant 0 : index
    %c0_0 = arith.constant 0 : index
    %0 = vector.load %arg1[%c0, %c0_0] : memref<8x16xf32, #tpu.memory_space<vmem>>, vector<8x16xf32>
    %c0_1 = arith.constant 0 : index
    %c0_2 = arith.constant 0 : index
    %1 = vector.load %arg2[%c0_1, %c0_2] : memref<16x32xf32, #tpu.memory_space<vmem>>, vector<16x32xf32>
    %cst = arith.constant dense<0.000000e+00> : vector<8x32xf32>
    %2 = tpu.matmul %0, %1, %cst {dimension_numbers = #tpu.dot_dimension_numbers<[1], [0], [0], [1], [0, 0, 1, 1], [], []>} : vector<8x16xf32>, vector<16x32xf32>, vector<8x32xf32> -> vector<8x32xf32>
    %c0_3 = arith.constant 0 : index
    %c0_4 = arith.constant 0 : index
    %3 = vector.load %arg5[%c0_3, %c0_4] : memref<3x128xf32, #tpu.memory_space<vmem>>, vector<1x32xf32>
    %4 = vector.broadcast %3 : vector<1x32xf32> to vector<8x32xf32>
    %5 = arith.addf %2, %4 : vector<8x32xf32>
    %cst_5 = arith.constant 0.000000e+00 : f32
    %6 = vector.broadcast %cst_5 : f32 to vector<8x32xf32>
    %7 = arith.maximumf %5, %6 : vector<8x32xf32>
    %c0_6 = arith.constant 0 : index
    %c0_7 = arith.constant 0 : index
    %8 = vector.load %arg3[%c0_6, %c0_7] : memref<32x32xf32, #tpu.memory_space<vmem>>, vector<32x32xf32>
    %cst_8 = arith.constant dense<0.000000e+00> : vector<8x32xf32>
    %9 = tpu.matmul %7, %8, %cst_8 {dimension_numbers = #tpu.dot_dimension_numbers<[1], [0], [0], [1], [0, 0, 1, 1], [], []>} : vector<8x32xf32>, vector<32x32xf32>, vector<8x32xf32> -> vector<8x32xf32>
    %c1 = arith.constant 1 : index
    %c0_9 = arith.constant 0 : index
    %10 = vector.load %arg5[%c1, %c0_9] : memref<3x128xf32, #tpu.memory_space<vmem>>, vector<1x32xf32>
    %11 = vector.broadcast %10 : vector<1x32xf32> to vector<8x32xf32>
    %12 = arith.addf %9, %11 : vector<8x32xf32>
    %cst_10 = arith.constant 0.000000e+00 : f32
    %13 = vector.broadcast %cst_10 : f32 to vector<8x32xf32>
    %14 = arith.maximumf %12, %13 : vector<8x32xf32>
    %c0_11 = arith.constant 0 : index
    %c0_12 = arith.constant 0 : index
    %15 = vector.load %arg4[%c0_11, %c0_12] : memref<32x128xf32, #tpu.memory_space<vmem>>, vector<32x128xf32>
    %cst_13 = arith.constant dense<0.000000e+00> : vector<8x128xf32>
    %16 = tpu.matmul %14, %15, %cst_13 {dimension_numbers = #tpu.dot_dimension_numbers<[1], [0], [0], [1], [0, 0, 1, 1], [], []>} : vector<8x32xf32>, vector<32x128xf32>, vector<8x128xf32> -> vector<8x128xf32>
    %c2 = arith.constant 2 : index
    %c0_14 = arith.constant 0 : index
    %17 = vector.load %arg5[%c2, %c0_14] : memref<3x128xf32, #tpu.memory_space<vmem>>, vector<1x128xf32>
    %18 = vector.broadcast %17 : vector<1x128xf32> to vector<8x128xf32>
    %19 = arith.addf %16, %18 : vector<8x128xf32>
    %20 = math.tanh %19 : vector<8x128xf32>
    %cst_15 = arith.constant 2.000000e+00 : f32
    %21 = vector.broadcast %cst_15 : f32 to vector<8x128xf32>
    %22 = arith.mulf %21, %20 : vector<8x128xf32>
    %c0_16 = arith.constant 0 : index
    %c0_17 = arith.constant 0 : index
    %23 = vector.load %arg6[%c0_16, %c0_17] : memref<8x128xf32, #tpu.memory_space<vmem>>, vector<8x128xf32>
    tpu.vector_store %arg6[%c0_16, %c0_17], %22 {strides = array<i32>} : memref<8x128xf32, #tpu.memory_space<vmem>>, vector<8x128xf32>,
    return
  }
  func.func @transform_0(%arg0: i32) -> (i32, i32) {
    %c0_i32 = arith.constant 0 : i32
    %c0_i32_0 = arith.constant 0 : i32
    return %arg0, %c0_i32 : i32, i32
  }
  func.func @transform_1(%arg0: i32) -> (i32, i32) {
    %c0_i32 = arith.constant 0 : i32
    %c0_i32_0 = arith.constant 0 : i32
    %c0_i32_1 = arith.constant 0 : i32
    return %c0_i32, %c0_i32_0 : i32, i32
  }
  func.func @transform_2(%arg0: i32) -> (i32, i32) {
    %c0_i32 = arith.constant 0 : i32
    %c0_i32_0 = arith.constant 0 : i32
    %c0_i32_1 = arith.constant 0 : i32
    return %c0_i32, %c0_i32_0 : i32, i32
  }
  func.func @transform_3(%arg0: i32) -> (i32, i32) {
    %c0_i32 = arith.constant 0 : i32
    %c0_i32_0 = arith.constant 0 : i32
    %c0_i32_1 = arith.constant 0 : i32
    return %c0_i32, %c0_i32_0 : i32, i32
  }
  func.func @transform_4(%arg0: i32) -> (i32, i32) {
    %c0_i32 = arith.constant 0 : i32
    %c0_i32_0 = arith.constant 0 : i32
    %c0_i32_1 = arith.constant 0 : i32
    return %c0_i32, %c0_i32_0 : i32, i32
  }
  func.func @transform_5(%arg0: i32) -> (i32, i32) {
    %c0_i32 = arith.constant 0 : i32
    %c0_i32_0 = arith.constant 0 : i32
    return %arg0, %c0_i32 : i32, i32
  }
}

</mosaic_0001>

<llo_original>
// kernel: tpu_custom_call.1
$region0: #{tpu_custom_call.1}
  #allocation0 [shape = 'u32[]', space=smem, size = 0x4, offset = 0x4, fixed_abs, tag = 'smem constant byte address 0x4 - core index']
  #allocation1 [shape = 'u32[144,128]{1,0:T(1,128)}', space=vmem, size = 0x12000, scoped, tag = 'internal scratch']
  %s0 = inlined_call_operand.hbm [shape: f32[8,16], index: 0, kind: input, shape index: {}]
  %s1 = inlined_call_operand.hbm [shape: f32[16,32], index: 1, kind: input, shape index: {}]
  %s2 = inlined_call_operand.hbm [shape: f32[32,32], index: 2, kind: input, shape index: {}]
  %s3 = inlined_call_operand.hbm [shape: f32[32,128], index: 3, kind: input, shape index: {}]
  %s4 = inlined_call_operand.vmem [shape: f32[3,128], index: 4, kind: input, shape index: {}]
  %s5 = inlined_call_operand.hbm [shape: f32[8,128], index: 5, kind: output, shape index: {}]
  %s6 = sld [smem:[#allocation0]]
  $region46: #{tpu_custom_call.1} parent=0
    _
  %s8 = ssub.s32 1, %s6
  %s9 = scalar_select 0, %s8, %s6
  $region1: #{tpu_custom_call.1} parent=0
    #allocation2 [shape = 'u8[4096]{0}', space=vmem, size = 0x1000, scoped, tag = 'input window, operand 0, single buffered']
    #allocation3 [shape = 's32[1]{0}', space=sflag, size = 0x4, scoped, tag = 'scoped memory for tpu_custom_call.1']
    #allocation4 [shape = 's32[1]{0}', space=sflag, size = 0x4, scoped, tag = 'scoped memory for tpu_custom_call.1']
    #allocation5 [shape = 'u8[8192]{0}', space=vmem, size = 0x2000, scoped, tag = 'input window, operand 1, single buffered']
    #allocation6 [shape = 's32[1]{0}', space=sflag, size = 0x4, scoped, tag = 'scoped memory for tpu_custom_call.1']
    #allocation7 [shape = 'u8[16384]{0}', space=vmem, size = 0x4000, scoped, tag = 'input window, operand 2, single buffered']
    #allocation8 [shape = 'u8[16384]{0}', space=vmem, size = 0x4000, scoped, tag = 'input window, operand 3, single buffered']
    #allocation9 [shape = 's32[1]{0}', space=sflag, size = 0x4, scoped, tag = 'scoped memory for tpu_custom_call.1']
    #allocation10 [shape = 'u8[4096]{0}', space=vmem, size = 0x1000, scoped, tag = 'output window, operand 0, single buffered']
    %10 = vsyncpa [#allocation3], 0
    %11 = vsyncpa [#allocation6], 0
    %12 = vsyncpa [#allocation9], 0
    %13 = vsyncpa [#allocation4], 0
    // Predicated region
    $region2: #{tpu_custom_call.1} parent=1 // pred_check
      _
    $region3: #{tpu_custom_call.1} parent=1 // pred_check_branch
      %15 = sbr.rel (0) target = $region5
    $region4: #{tpu_custom_call.1} parent=1 // pred_region
      %s17 = ssub.s32 128, 128
      %18 = vsyncadd [#allocation3], %s17
      %s20 = sshll.u32 [#allocation2], 4
      %s21 = int_to_ptr.vmem [resolvable:$true] %s20
      %23 = dma.hbm_to_vmem [thread:$0]  %s0, 128, %s21, [#allocation3]
    $region5: #{tpu_custom_call.1} parent=1 // pred_fallthru
      _
    // Predicated region
    $region6: #{tpu_custom_call.1} parent=1 // pred_check
      _
    $region7: #{tpu_custom_call.1} parent=1 // pred_check_branch
      %25 = sbr.rel (0) target = $region9
    $region8: #{tpu_custom_call.1} parent=1 // pred_region
      %s27 = ssub.s32 256, 256
      %28 = vsyncadd [#allocation6], %s27
      %s29 = sshll.u32 [#allocation5], 4
      %s30 = int_to_ptr.vmem [resolvable:$true] %s29
      %35 = dma.hbm_to_vmem [thread:$0]  %s1, 256, %s30, [#allocation6], 128, 128, 8
    $region9: #{tpu_custom_call.1} parent=1 // pred_fallthru
      _
    // Predicated region
    $region10: #{tpu_custom_call.1} parent=1 // pred_check
      _
    $region11: #{tpu_custom_call.1} parent=1 // pred_check_branch
      %37 = sbr.rel (0) target = $region13
    $region12: #{tpu_custom_call.1} parent=1 // pred_region
      %s39 = ssub.s32 512, 512
      %40 = vsyncadd [#allocation6], %s39
      %s41 = sshll.u32 [#allocation7], 4
      %s42 = int_to_ptr.vmem [resolvable:$true] %s41
      %47 = dma.hbm_to_vmem [thread:$0]  %s2, 512, %s42, [#allocation6], 128, 128, 8
    $region13: #{tpu_custom_call.1} parent=1 // pred_fallthru
      _
    // Predicated region
    $region14: #{tpu_custom_call.1} parent=1 // pred_check
      _
    $region15: #{tpu_custom_call.1} parent=1 // pred_check_branch
      %49 = sbr.rel (0) target = $region17
    $region16: #{tpu_custom_call.1} parent=1 // pred_region
      %s51 = ssub.s32 512, 512
      %52 = vsyncadd [#allocation9], %s51
      %s53 = sshll.u32 [#allocation8], 4
      %s54 = int_to_ptr.vmem [resolvable:$true] %s53
      %59 = dma.hbm_to_vmem [thread:$0]  %s3, 512, %s54, [#allocation9], 128, 128, 8
    $region17: #{tpu_custom_call.1} parent=1 // pred_fallthru
      _
    // Predicated region
    $region18: #{tpu_custom_call.1} parent=1 // pred_check
      _
    $region19: #{tpu_custom_call.1} parent=1 // pred_check_branch
      %61 = sbr.rel (0) target = $region21
    $region20: #{tpu_custom_call.1} parent=1 // pred_region
      _
    $region21: #{tpu_custom_call.1} parent=1 // pred_fallthru
      _
    // Predicated region
    $region22: #{tpu_custom_call.1} parent=1 // pred_check
      _
    $region23: #{tpu_custom_call.1} parent=1 // pred_check_branch
      %63 = sbr.rel (0) target = $region25
    $region24: #{tpu_custom_call.1} parent=1 // pred_region
      %64 = dma.done [#allocation3], 128
    $region25: #{tpu_custom_call.1} parent=1 // pred_fallthru
      _
    // Predicated region
    $region26: #{tpu_custom_call.1} parent=1 // pred_check
      _
    $region27: #{tpu_custom_call.1} parent=1 // pred_check_branch
      %66 = sbr.rel (0) target = $region29
    $region28: #{tpu_custom_call.1} parent=1 // pred_region
      %67 = dma.done [#allocation6], 256
    $region29: #{tpu_custom_call.1} parent=1 // pred_fallthru
      _
    // Predicated region
    $region30: #{tpu_custom_call.1} parent=1 // pred_check
      _
    $region31: #{tpu_custom_call.1} parent=1 // pred_check_branch
      %69 = sbr.rel (0) target = $region33
    $region32: #{tpu_custom_call.1} parent=1 // pred_region
      %70 = dma.done [#allocation6], 512
    $region33: #{tpu_custom_call.1} parent=1 // pred_fallthru
      _
    // Predicated region
    $region34: #{tpu_custom_call.1} parent=1 // pred_check
      _
    $region35: #{tpu_custom_call.1} parent=1 // pred_check_branch
      %72 = sbr.rel (0) target = $region37
    $region36: #{tpu_custom_call.1} parent=1 // pred_region
      %73 = dma.done [#allocation9], 512
    $region37: #{tpu_custom_call.1} parent=1 // pred_fallthru
      _
    %v74 = vld [vmem:[#allocation2] sm:$0xff]
    %v75 = vld [vmem:[#allocation5] sm:$0xff]
    %v76 = vld [vmem:[#allocation5 + $0x8] sm:$0xff]
    %v77 = vld [vmem:[%s4] sm:$0x1]
    %v78 = vlaneseq
    %v79 = vshrl.u32 %v78, 7
    %v80 = vsub.s32 0, %v79
    %v81 = vrot.slane %v77, %v80
    %vm82 = vcmask 130048
    %v84 = vsel %vm82, %v74, 0
    %86 = vmatprep.subr.mxu0 0.0
    %87 = vmatpush1.msra.mxu0 %v75
    %88 = vmatprep.subr.mxu0 0.0
    %89 = vmatpush1.msra.mxu0 %v76
    %90 = vmatprep.subr.mxu0 0.0
    %91 = vmatpush1.msra.mxu0 0.0
    %92 = vmatprep.subr.mxu0 0.0
    %93 = vmatpush1.msra.mxu0 0.0
    %94 = vmatprep.subr.mxu0 0.0
    %95 = vmatpush1.msra.mxu0 0.0
    %96 = vmatprep.subr.mxu0 0.0
    %97 = vmatpush1.msra.mxu0 0.0
    %98 = vmatprep.subr.mxu0 0.0
    %99 = vmatpush1.msra.mxu0 0.0
    %100 = vmatprep.subr.mxu0 0.0
    %101 = vmatpush1.msra.mxu0 0.0
    %102 = vmatprep.subr.mxu0 0.0
    %103 = vmatpush1.msra.mxu0 0.0
    %104 = vmatprep.subr.mxu0 0.0
    %105 = vmatpush1.msra.mxu0 0.0
    %106 = vmatprep.subr.mxu0 0.0
    %107 = vmatpush1.msra.mxu0 0.0
    %108 = vmatprep.subr.mxu0 0.0
    %109 = vmatpush1.msra.mxu0 0.0
    %110 = vmatprep.subr.mxu0 0.0
    %111 = vmatpush1.msra.mxu0 0.0
    %112 = vmatprep.subr.mxu0 0.0
    %113 = vmatpush1.msra.mxu0 0.0
    %114 = vmatprep.subr.mxu0 0.0
    %115 = vmatpush1.msra.mxu0 0.0
    %116 = vmatprep.subr.mxu0 0.0
    %117 = vmatpush1.msra.mxu0 0.0
    %118 = vmatprep.subr.mxu0 0.0
    %119 = vmatpush1.msra.mxu0 0.0
    %120 = vmatprep.subr.mxu0 0.0
    %121 = vmatpush1.msra.mxu0 0.0
    %122 = vmatprep.subr.mxu0 0.0
    %123 = vmatpush1.msra.mxu0 0.0
    %124 = vmatprep.subr.mxu0 0.0
    %125 = vmatpush1.msra.mxu0 0.0
    %126 = vmatprep.subr.mxu0 0.0
    %127 = vmatpush1.msra.mxu0 0.0
    %128 = vmatprep.subr.mxu0 0.0
    %129 = vmatpush1.msra.mxu0 0.0
    %130 = vmatprep.subr.mxu0 0.0
    %131 = vmatpush1.msra.mxu0 0.0
    %132 = vmatprep.subr.mxu0 0.0
    %133 = vmatpush1.msra.mxu0 0.0
    %134 = vmatprep.subr.mxu0 0.0
    %135 = vmatpush1.msra.mxu0 0.0
    %136 = vmatprep.subr.mxu0 0.0
    %137 = vmatpush1.msra.mxu0 0.0
    %138 = vmatprep.subr.mxu0 0.0
    %139 = vmatpush1.msra.mxu0 0.0
    %140 = vmatprep.subr.mxu0 0.0
    %141 = vmatpush1.msra.mxu0 0.0
    %142 = vmatprep.subr.mxu0 0.0
    %143 = vmatpush1.msra.mxu0 0.0
    %144 = vmatprep.subr.mxu0 0.0
    %145 = vmatpush1.msra.mxu0 0.0
    %146 = vmatprep.subr.mxu0 0.0
    %147 = vmatpush1.msra.mxu0 0.0
    %148 = vmatprep.subr.mxu0 0.0
    %149 = vmatpush1.msra.mxu0 0.0
    %150 = vmatprep.mubr.f32.mxu0 0.0
    %151 = vmatmul.mubr.f32.gmra.mrb[0].mxu0 %v84
    %v152 = vpop.f32.mrb[0].mxu0
    %v153 = vadd.f32 %v81, %v152
    %v154 = vpop.f32.mrb[0].mxu0
    %155 = vdwg.mxu0
    %v156 = vmax.f32 %v153, 0.0
    %v157 = vld [vmem:[#allocation7] sm:$0xff]
    %v158 = vld [vmem:[#allocation7 + $0x8] sm:$0xff]
    %v159 = vld [vmem:[#allocation7 + $0x10] sm:$0xff]
    %v160 = vld [vmem:[#allocation7 + $0x18] sm:$0xff]
    %v161 = vld [vmem:[%s4 + $0x1] sm:$0x1]
    %v162 = vlaneseq
    %v163 = vshrl.u32 %v162, 7
    %v164 = vsub.s32 0, %v163
    %v165 = vrot.slane %v161, %v164
    %vm166 = vcmask 261120
    %v168 = vsel %vm166, %v156, 0
    %170 = vmatprep.subr.mxu0 0.0
    %171 = vmatpush1.msra.mxu0 %v157
    %172 = vmatprep.subr.mxu0 0.0
    %173 = vmatpush1.msra.mxu0 %v158
    %174 = vmatprep.subr.mxu0 0.0
    %175 = vmatpush1.msra.mxu0 %v159
    %176 = vmatprep.subr.mxu0 0.0
    %177 = vmatpush1.msra.mxu0 %v160
    %178 = vmatprep.subr.mxu0 0.0
    %179 = vmatpush1.msra.mxu0 0.0
    %180 = vmatprep.subr.mxu0 0.0
    %181 = vmatpush1.msra.mxu0 0.0
    %182 = vmatprep.subr.mxu0 0.0
    %183 = vmatpush1.msra.mxu0 0.0
    %184 = vmatprep.subr.mxu0 0.0
    %185 = vmatpush1.msra.mxu0 0.0
    %186 = vmatprep.subr.mxu0 0.0
    %187 = vmatpush1.msra.mxu0 0.0
    %188 = vmatprep.subr.mxu0 0.0
    %189 = vmatpush1.msra.mxu0 0.0
    %190 = vmatprep.subr.mxu0 0.0
    %191 = vmatpush1.msra.mxu0 0.0
    %192 = vmatprep.subr.mxu0 0.0
    %193 = vmatpush1.msra.mxu0 0.0
    %194 = vmatprep.subr.mxu0 0.0
    %195 = vmatpush1.msra.mxu0 0.0
    %196 = vmatprep.subr.mxu0 0.0
    %197 = vmatpush1.msra.mxu0 0.0
    %198 = vmatprep.subr.mxu0 0.0
    %199 = vmatpush1.msra.mxu0 0.0
    %200 = vmatprep.subr.mxu0 0.0
    %201 = vmatpush1.msra.mxu0 0.0
    %202 = vmatprep.subr.mxu0 0.0
    %203 = vmatpush1.msra.mxu0 0.0
    %204 = vmatprep.subr.mxu0 0.0
    %205 = vmatpush1.msra.mxu0 0.0
    %206 = vmatprep.subr.mxu0 0.0
    %207 = vmatpush1.msra.mxu0 0.0
    %208 = vmatprep.subr.mxu0 0.0
    %209 = vmatpush1.msra.mxu0 0.0
    %210 = vmatprep.subr.mxu0 0.0
    %211 = vmatpush1.msra.mxu0 0.0
    %212 = vmatprep.subr.mxu0 0.0
    %213 = vmatpush1.msra.mxu0 0.0
    %214 = vmatprep.subr.mxu0 0.0
    %215 = vmatpush1.msra.mxu0 0.0
    %216 = vmatprep.subr.mxu0 0.0
    %217 = vmatpush1.msra.mxu0 0.0
    %218 = vmatprep.subr.mxu0 0.0
    %219 = vmatpush1.msra.mxu0 0.0
    %220 = vmatprep.subr.mxu0 0.0
    %221 = vmatpush1.msra.mxu0 0.0
    %222 = vmatprep.subr.mxu0 0.0
    %223 = vmatpush1.msra.mxu0 0.0
    %224 = vmatprep.subr.mxu0 0.0
    %225 = vmatpush1.msra.mxu0 0.0
    %226 = vmatprep.subr.mxu0 0.0
    %227 = vmatpush1.msra.mxu0 0.0
    %228 = vmatprep.subr.mxu0 0.0
    %229 = vmatpush1.msra.mxu0 0.0
    %230 = vmatprep.subr.mxu0 0.0
    %231 = vmatpush1.msra.mxu0 0.0
    %232 = vmatprep.subr.mxu0 0.0
    %233 = vmatpush1.msra.mxu0 0.0
    %234 = vmatprep.mubr.f32.mxu0 0.0
    %235 = vmatmul.mubr.f32.gmra.mrb[0].mxu0 %v168
    %v236 = vpop.f32.mrb[0].mxu0
    %v237 = vadd.f32 %v165, %v236
    %v238 = vpop.f32.mrb[0].mxu0
    %239 = vdwg.mxu0
    %v240 = vmax.f32 %v237, 0.0
    %v241 = vld [vmem:[#allocation8] sm:$0xff]
    %v242 = vld [vmem:[#allocation8 + $0x8] sm:$0xff]
    %v243 = vld [vmem:[#allocation8 + $0x10] sm:$0xff]
    %v244 = vld [vmem:[#allocation8 + $0x18] sm:$0xff]
    %v245 = vld [vmem:[%s4 + $0x2] sm:$0x1]
    %v246 = vlaneseq
    %v247 = vshrl.u32 %v246, 7
    %v248 = vsub.s32 0, %v247
    %v249 = vrot.slane %v245, %v248
    %v251 = vsel %vm166, %v240, 0
    %253 = vmatprep.subr.mxu0 0.0
    %254 = vmatpush1.msra.mxu0 %v241
    %255 = vmatprep.subr.mxu0 0.0
    %256 = vmatpush1.msra.mxu0 %v242
    %257 = vmatprep.subr.mxu0 0.0
    %258 = vmatpush1.msra.mxu0 %v243
    %259 = vmatprep.subr.mxu0 0.0
    %260 = vmatpush1.msra.mxu0 %v244
    %261 = vmatprep.subr.mxu0 0.0
    %262 = vmatpush1.msra.mxu0 0.0
    %263 = vmatprep.subr.mxu0 0.0
    %264 = vmatpush1.msra.mxu0 0.0
    %265 = vmatprep.subr.mxu0 0.0
    %266 = vmatpush1.msra.mxu0 0.0
    %267 = vmatprep.subr.mxu0 0.0
    %268 = vmatpush1.msra.mxu0 0.0
    %269 = vmatprep.subr.mxu0 0.0
    %270 = vmatpush1.msra.mxu0 0.0
    %271 = vmatprep.subr.mxu0 0.0
    %272 = vmatpush1.msra.mxu0 0.0
    %273 = vmatprep.subr.mxu0 0.0
    %274 = vmatpush1.msra.mxu0 0.0
    %275 = vmatprep.subr.mxu0 0.0
    %276 = vmatpush1.msra.mxu0 0.0
    %277 = vmatprep.subr.mxu0 0.0
    %278 = vmatpush1.msra.mxu0 0.0
    %279 = vmatprep.subr.mxu0 0.0
    %280 = vmatpush1.msra.mxu0 0.0
    %281 = vmatprep.subr.mxu0 0.0
    %282 = vmatpush1.msra.mxu0 0.0
    %283 = vmatprep.subr.mxu0 0.0
    %284 = vmatpush1.msra.mxu0 0.0
    %285 = vmatprep.subr.mxu0 0.0
    %286 = vmatpush1.msra.mxu0 0.0
    %287 = vmatprep.subr.mxu0 0.0
    %288 = vmatpush1.msra.mxu0 0.0
    %289 = vmatprep.subr.mxu0 0.0
    %290 = vmatpush1.msra.mxu0 0.0
    %291 = vmatprep.subr.mxu0 0.0
    %292 = vmatpush1.msra.mxu0 0.0
    %293 = vmatprep.subr.mxu0 0.0
    %294 = vmatpush1.msra.mxu0 0.0
    %295 = vmatprep.subr.mxu0 0.0
    %296 = vmatpush1.msra.mxu0 0.0
    %297 = vmatprep.subr.mxu0 0.0
    %298 = vmatpush1.msra.mxu0 0.0
    %299 = vmatprep.subr.mxu0 0.0
    %300 = vmatpush1.msra.mxu0 0.0
    %301 = vmatprep.subr.mxu0 0.0
    %302 = vmatpush1.msra.mxu0 0.0
    %303 = vmatprep.subr.mxu0 0.0
    %304 = vmatpush1.msra.mxu0 0.0
    %305 = vmatprep.subr.mxu0 0.0
    %306 = vmatpush1.msra.mxu0 0.0
    %307 = vmatprep.subr.mxu0 0.0
    %308 = vmatpush1.msra.mxu0 0.0
    %309 = vmatprep.subr.mxu0 0.0
    %310 = vmatpush1.msra.mxu0 0.0
    %311 = vmatprep.subr.mxu0 0.0
    %312 = vmatpush1.msra.mxu0 0.0
    %313 = vmatprep.subr.mxu0 0.0
    %314 = vmatpush1.msra.mxu0 0.0
    %315 = vmatprep.subr.mxu0 0.0
    %316 = vmatpush1.msra.mxu0 0.0
    %317 = vmatprep.mubr.f32.mxu0 0.0
    %318 = vmatmul.mubr.f32.gmra.mrb[0].mxu0 %v251
    %v319 = vpop.f32.mrb[0].mxu0
    %v320 = vadd.f32 %v249, %v319
    %v321 = vpop.f32.mrb[0].mxu0
    %322 = vdwg.mxu0
    %v323 = vtanh.pop %v320
    %v324 = vmul.f32 %v323, 2.0
    %325 = vst [vmem:[#allocation10] sm:$0xff] %v324
    // Predicated region
    $region38: #{tpu_custom_call.1} parent=1 // pred_check
      _
    $region39: #{tpu_custom_call.1} parent=1 // pred_check_branch
      %327 = sbr.rel (0) target = $region41
    $region40: #{tpu_custom_call.1} parent=1 // pred_region
      %s329 = ssub.s32 128, 128
      %330 = vsyncadd [#allocation4], %s329
      %s332 = sshll.u32 [#allocation10], 4
      %s333 = int_to_ptr.vmem [resolvable:$true] %s332
      %335 = dma.vmem_to_hbm [thread:$0]  %s333, 128, %s5, [#allocation4]
    $region41: #{tpu_custom_call.1} parent=1 // pred_fallthru
      _
    // Predicated region
    $region42: #{tpu_custom_call.1} parent=1 // pred_check
      _
    $region43: #{tpu_custom_call.1} parent=1 // pred_check_branch
      %337 = sbr.rel (0) target = $region45
    $region44: #{tpu_custom_call.1} parent=1 // pred_region
      %338 = dma.done [#allocation4], 128
    $region45: #{tpu_custom_call.1} parent=1 // pred_fallthru
      _
    %339 = vsyncpa [#allocation3], 1
    %340 = vsyncpa [#allocation6], 1
    %341 = vsyncpa [#allocation9], 1
    %342 = vsyncpa [#allocation4], 1

</llo_original>
